<compile_context>
chip_gen: v7x
topology: tpu7x:2x2x1
jax: 0.10.0
libtpu: 0.0.40
codegen_flags: <defaults>
</compile_context>

<pallas_src>
import functools
import math

import jax
import jax.numpy as jnp
from jax import lax
from jax.experimental import pallas as pl
from jax.experimental.pallas import tpu as pltpu


def _bert_output_kernel(x_ref, w_ref, b_ref, res_ref, g_ref, beta_ref,
                        out_ref, acc_ref, *, eps):
    # Block shapes:
    #   x_ref:   (tm, tk)     w_ref: (tk, H)
    #   b_ref / g_ref / beta_ref: (1, H)
    #   res_ref: (tm, H)      out_ref: (tm, H)    acc_ref: (tm, H) f32 scratch
    k = pl.program_id(1)

    @pl.when(k == 0)
    def _():
        acc_ref[...] = jnp.zeros_like(acc_ref)

    # Dense projection, accumulated in f32 on the MXU.
    acc_ref[...] += jnp.dot(x_ref[...], w_ref[...],
                            preferred_element_type=jnp.float32)

    @pl.when(k == pl.num_programs(1) - 1)
    def _():
        y = acc_ref[...] + b_ref[...].astype(jnp.float32)
        # (dropout is identity in eval mode)
        y = y + res_ref[...].astype(jnp.float32)

        # LayerNorm over the hidden dim (eps = 1e-12, matches nn.LayerNorm).
        mean = jnp.mean(y, axis=-1, keepdims=True)
        centered = y - mean
        var = jnp.mean(centered * centered, axis=-1, keepdims=True)
        inv = lax.rsqrt(var + eps)
        normed = centered * inv
        out_ref[...] = (normed * g_ref[...].astype(jnp.float32)
                        + beta_ref[...].astype(jnp.float32)).astype(out_ref.dtype)


def _pick_tile(dim, preferred, quantum):
    """Largest divisor of `dim` that is <= preferred and a multiple of
    `quantum`; falls back to the full dim (always legal for BlockSpec)."""
    if dim <= preferred:
        return dim
    t = preferred - (preferred % quantum)
    while t >= quantum:
        if dim % t == 0:
            return t
        t -= quantum
    return dim


def bert_output(hidden_states, input_tensor, params, *, eps=1e-12,
                tm_pref=256, tk_pref=512):
    """hidden_states: [B, S, I], input_tensor: [B, S, H]. Returns [B, S, H]."""
    B, S, I = hidden_states.shape
    Bi, Si, H = input_tensor.shape
    assert (B, S) == (Bi, Si)

    M = B * S
    x = hidden_states.reshape(M, I)
    res = input_tensor.reshape(M, H)
    w = params["w"]                      # [I, H]  ("x @ W + b" convention)
    b = params["b"].reshape(1, H)
    gamma = params["gamma"].reshape(1, H)
    beta = params["beta"].reshape(1, H)

    tm = _pick_tile(M, tm_pref, 8)       # row tile   (sublane quantum 8)
    tk = _pick_tile(I, tk_pref, 128)     # reduce tile (lane quantum 128)

    grid = (M // tm, I // tk)

    x_spec = pl.BlockSpec((tm, tk), lambda i, k: (i, k))
    w_spec = pl.BlockSpec((tk, H), lambda i, k: (k, 0))
    vec_spec = pl.BlockSpec((1, H), lambda i, k: (0, 0))
    res_spec = pl.BlockSpec((tm, H), lambda i, k: (i, 0))
    out_spec = pl.BlockSpec((tm, H), lambda i, k: (i, 0))

    kernel = functools.partial(_bert_output_kernel, eps=eps)

    out = pl.pallas_call(
        kernel,
        out_shape=jax.ShapeDtypeStruct((M, H), input_tensor.dtype),
        grid_spec=pltpu.PrefetchScalarGridSpec(
            num_scalar_prefetch=0,
            grid=grid,
            in_specs=[x_spec, w_spec, vec_spec, res_spec, vec_spec, vec_spec],
            out_specs=out_spec,
            scratch_shapes=[pltpu.VMEM((tm, H), jnp.float32)],
        ),
        compiler_params=pltpu.CompilerParams(
            dimension_semantics=("parallel", "arbitrary")),
    )(x, w, b, res, gamma, beta)

    return out.reshape(B, S, H)


def _reference(hidden_states, input_tensor, params, eps=1e-12):
    y = hidden_states @ params["w"] + params["b"]
    y = y + input_tensor
    mean = jnp.mean(y, axis=-1, keepdims=True)
    var = jnp.mean((y - mean) ** 2, axis=-1, keepdims=True)
    normed = (y - mean) / jnp.sqrt(var + eps)
    return normed * params["gamma"] + params["beta"]


if __name__ == "__main__":
    B, S, H = 2, 8, 32          # batch, seq, hidden
    I = 64                      # intermediate_size
    key = jax.random.PRNGKey(0)
    ks = jax.random.split(key, 6)

    hidden_states = jax.random.normal(ks[0], (B, S, I), dtype=jnp.float32)
    input_tensor = jax.random.normal(ks[1], (B, S, H), dtype=jnp.float32)

    # nn.Linear(I, H) params stored as [I, H] for the "x @ W + b" convention.
    init_scale = 1.0 / math.sqrt(I)
    params = {
        "w": jax.random.uniform(ks[2], (I, H), jnp.float32, -init_scale, init_scale),
        "b": jax.random.uniform(ks[3], (H,), jnp.float32, -init_scale, init_scale),
        "gamma": 1.0 + 0.1 * jax.random.normal(ks[4], (H,), dtype=jnp.float32),
        "beta": 0.1 * jax.random.normal(ks[5], (H,), dtype=jnp.float32),
    }

    out = bert_output(hidden_states, input_tensor, params)
    out = jax.block_until_ready(out)

    ref = _reference(hidden_states, input_tensor, params)
    assert out.shape == (B, S, H)
    assert jnp.allclose(out, ref, atol=1e-5, rtol=1e-5), "mismatch vs reference"

    print("KERNEL_OK")
</pallas_src>

<mosaic_0001>
module attributes {stable_mosaic.version = 11 : i64} {
  func.func @_bert_output_kernel(%arg0: i32, %arg1: i32, %arg2: memref<16x64xf32, #tpu.memory_space<vmem>>, %arg3: memref<64x32xf32, #tpu.memory_space<vmem>>, %arg4: memref<1x32xf32, #tpu.memory_space<vmem>>, %arg5: memref<16x32xf32, #tpu.memory_space<vmem>>, %arg6: memref<1x32xf32, #tpu.memory_space<vmem>>, %arg7: memref<1x32xf32, #tpu.memory_space<vmem>>, %arg8: memref<16x32xf32, #tpu.memory_space<vmem>>, %arg9: memref<16x32xf32, #tpu.memory_space<vmem>>) attributes {dimension_semantics = [#tpu.dimension_semantics<parallel>, #tpu.dimension_semantics<arbitrary>], iteration_bounds = array<i64: 1, 1>, scalar_prefetch = 0 : i64, scratch_operands = 1 : i64, tpu.core_type = #tpu.core_type<tc>, window_params = [{transform_indices = @transform_0, window_bounds = array<i64: 16, 64>}, {transform_indices = @transform_1, window_bounds = array<i64: 64, 32>}, {pipeline_mode = #tpu.pipeline_mode<synchronous>, transform_indices = @transform_2, window_bounds = array<i64: 1, 32>}, {transform_indices = @transform_3, window_bounds = array<i64: 16, 32>}, {pipeline_mode = #tpu.pipeline_mode<synchronous>, transform_indices = @transform_4, window_bounds = array<i64: 1, 32>}, {pipeline_mode = #tpu.pipeline_mode<synchronous>, transform_indices = @transform_5, window_bounds = array<i64: 1, 32>}, {transform_indices = @transform_6, window_bounds = array<i64: 16, 32>}]} {
    %c0_i32 = arith.constant 0 : i32
    %0 = arith.cmpi eq, %arg1, %c0_i32 : i32
    %1 = arith.extui %0 : i1 to i32
    %c0_i32_0 = arith.constant 0 : i32
    %2 = arith.cmpi ne, %1, %c0_i32_0 : i32
    scf.if %2 {
      %cst_10 = arith.constant 0.000000e+00 : f32
      %12 = vector.broadcast %cst_10 : f32 to vector<16x32xf32>
      %c0_11 = arith.constant 0 : index
      %c0_12 = arith.constant 0 : index
      %13 = vector.load %arg9[%c0_11, %c0_12] : memref<16x32xf32, #tpu.memory_space<vmem>>, vector<16x32xf32>
      tpu.vector_store %arg9[%c0_11, %c0_12], %12 {strides = array<i32>} : memref<16x32xf32, #tpu.memory_space<vmem>>, vector<16x32xf32>,
    } else {
    }
    %c0 = arith.constant 0 : index
    %c0_1 = arith.constant 0 : index
    %3 = vector.load %arg9[%c0, %c0_1] : memref<16x32xf32, #tpu.memory_space<vmem>>, vector<16x32xf32>
    %c0_2 = arith.constant 0 : index
    %c0_3 = arith.constant 0 : index
    %4 = vector.load %arg2[%c0_2, %c0_3] : memref<16x64xf32, #tpu.memory_space<vmem>>, vector<16x64xf32>
    %c0_4 = arith.constant 0 : index
    %c0_5 = arith.constant 0 : index
    %5 = vector.load %arg3[%c0_4, %c0_5] : memref<64x32xf32, #tpu.memory_space<vmem>>, vector<64x32xf32>
    %cst = arith.constant dense<0.000000e+00> : vector<16x32xf32>
    %6 = tpu.matmul %4, %5, %cst {dimension_numbers = #tpu.dot_dimension_numbers<[1], [0], [0], [1], [0, 0, 1, 1], [], []>} : vector<16x64xf32>, vector<64x32xf32>, vector<16x32xf32> -> vector<16x32xf32>
    %7 = arith.addf %3, %6 : vector<16x32xf32>
    %c0_6 = arith.constant 0 : index
    %c0_7 = arith.constant 0 : index
    %8 = vector.load %arg9[%c0_6, %c0_7] : memref<16x32xf32, #tpu.memory_space<vmem>>, vector<16x32xf32>
    tpu.vector_store %arg9[%c0_6, %c0_7], %7 {strides = array<i32>} : memref<16x32xf32, #tpu.memory_space<vmem>>, vector<16x32xf32>,
    %c0_i32_8 = arith.constant 0 : i32
    %9 = arith.cmpi eq, %arg1, %c0_i32_8 : i32
    %10 = arith.extui %9 : i1 to i32
    %c0_i32_9 = arith.constant 0 : i32
    %11 = arith.cmpi ne, %10, %c0_i32_9 : i32
    scf.if %11 {
      %c0_10 = arith.constant 0 : index
      %c0_11 = arith.constant 0 : index
      %12 = vector.load %arg9[%c0_10, %c0_11] : memref<16x32xf32, #tpu.memory_space<vmem>>, vector<16x32xf32>
      %c0_12 = arith.constant 0 : index
      %c0_13 = arith.constant 0 : index
      %13 = vector.load %arg4[%c0_12, %c0_13] : memref<1x32xf32, #tpu.memory_space<vmem>>, vector<1x32xf32>
      %14 = vector.broadcast %13 : vector<1x32xf32> to vector<16x32xf32>
      %15 = arith.addf %12, %14 : vector<16x32xf32>
      %c0_14 = arith.constant 0 : index
      %c0_15 = arith.constant 0 : index
      %16 = vector.load %arg5[%c0_14, %c0_15] : memref<16x32xf32, #tpu.memory_space<vmem>>, vector<16x32xf32>
      %17 = arith.addf %15, %16 : vector<16x32xf32>
      %cst_16 = arith.constant dense<0.000000e+00> : vector<16xf32>
      %18 = vector.multi_reduction <add>, %17, %cst_16 [1] : vector<16x32xf32> to vector<16xf32>
      %19 = vector.shape_cast %18 : vector<16xf32> to vector<16x1xf32>
      %cst_17 = arith.constant 3.200000e+01 : f32
      %20 = vector.broadcast %cst_17 : f32 to vector<16x1xf32>
      %21 = arith.divf %19, %20 : vector<16x1xf32>
      %22 = vector.broadcast %21 : vector<16x1xf32> to vector<16x32xf32>
      %23 = arith.subf %17, %22 : vector<16x32xf32>
      %24 = arith.mulf %23, %23 : vector<16x32xf32>
      %cst_18 = arith.constant dense<0.000000e+00> : vector<16xf32>
      %25 = vector.multi_reduction <add>, %24, %cst_18 [1] : vector<16x32xf32> to vector<16xf32>
      %26 = vector.shape_cast %25 : vector<16xf32> to vector<16x1xf32>
      %cst_19 = arith.constant 3.200000e+01 : f32
      %27 = vector.broadcast %cst_19 : f32 to vector<16x1xf32>
      %28 = arith.divf %26, %27 : vector<16x1xf32>
      %cst_20 = arith.constant 9.99999996E-13 : f32
      %29 = vector.broadcast %cst_20 : f32 to vector<16x1xf32>
      %30 = arith.addf %28, %29 : vector<16x1xf32>
      %31 = math.rsqrt %30 : vector<16x1xf32>
      %32 = vector.broadcast %31 : vector<16x1xf32> to vector<16x32xf32>
      %33 = arith.mulf %23, %32 : vector<16x32xf32>
      %c0_21 = arith.constant 0 : index
      %c0_22 = arith.constant 0 : index
      %34 = vector.load %arg6[%c0_21, %c0_22] : memref<1x32xf32, #tpu.memory_space<vmem>>, vector<1x32xf32>
      %35 = vector.broadcast %34 : vector<1x32xf32> to vector<16x32xf32>
      %36 = arith.mulf %33, %35 : vector<16x32xf32>
      %c0_23 = arith.constant 0 : index
      %c0_24 = arith.constant 0 : index
      %37 = vector.load %arg7[%c0_23, %c0_24] : memref<1x32xf32, #tpu.memory_space<vmem>>, vector<1x32xf32>
      %38 = vector.broadcast %37 : vector<1x32xf32> to vector<16x32xf32>
      %39 = arith.addf %36, %38 : vector<16x32xf32>
      %c0_25 = arith.constant 0 : index
      %c0_26 = arith.constant 0 : index
      %40 = vector.load %arg8[%c0_25, %c0_26] : memref<16x32xf32, #tpu.memory_space<vmem>>, vector<16x32xf32>
      tpu.vector_store %arg8[%c0_25, %c0_26], %39 {strides = array<i32>} : memref<16x32xf32, #tpu.memory_space<vmem>>, vector<16x32xf32>,
    } else {
    }
    return
  }
  func.func @transform_0(%arg0: i32, %arg1: i32) -> (i32, i32) {
    %c0_i32 = arith.constant 0 : i32
    return %arg0, %arg1 : i32, i32
  }
  func.func @transform_1(%arg0: i32, %arg1: i32) -> (i32, i32) {
    %c0_i32 = arith.constant 0 : i32
    %c0_i32_0 = arith.constant 0 : i32
    return %arg1, %c0_i32 : i32, i32
  }
  func.func @transform_2(%arg0: i32, %arg1: i32) -> (i32, i32) {
    %c0_i32 = arith.constant 0 : i32
    %c0_i32_0 = arith.constant 0 : i32
    %c0_i32_1 = arith.constant 0 : i32
    return %c0_i32, %c0_i32_0 : i32, i32
  }
  func.func @transform_3(%arg0: i32, %arg1: i32) -> (i32, i32) {
    %c0_i32 = arith.constant 0 : i32
    %c0_i32_0 = arith.constant 0 : i32
    return %arg0, %c0_i32 : i32, i32
  }
  func.func @transform_4(%arg0: i32, %arg1: i32) -> (i32, i32) {
    %c0_i32 = arith.constant 0 : i32
    %c0_i32_0 = arith.constant 0 : i32
    %c0_i32_1 = arith.constant 0 : i32
    return %c0_i32, %c0_i32_0 : i32, i32
  }
  func.func @transform_5(%arg0: i32, %arg1: i32) -> (i32, i32) {
    %c0_i32 = arith.constant 0 : i32
    %c0_i32_0 = arith.constant 0 : i32
    %c0_i32_1 = arith.constant 0 : i32
    return %c0_i32, %c0_i32_0 : i32, i32
  }
  func.func @transform_6(%arg0: i32, %arg1: i32) -> (i32, i32) {
    %c0_i32 = arith.constant 0 : i32
    %c0_i32_0 = arith.constant 0 : i32
    return %arg0, %c0_i32 : i32, i32
  }
}

</mosaic_0001>

<llo_original>
// kernel: tpu_custom_call.1
$region0: #{tpu_custom_call.1}
  #allocation0 [shape = 'u32[]', space=smem, size = 0x4, offset = 0x4, fixed_abs, tag = 'smem constant byte address 0x4 - core index']
  #allocation1 [shape = 'u32[144,128]{1,0:T(1,128)}', space=vmem, size = 0x12000, scoped, tag = 'internal scratch']
  #allocation2 [shape = 'f32[16,32]{1,0:T(8,128)}', space=vmem, size = 0x2000, scoped, tag = 'scratch operand']
  %s0 = inlined_call_operand.vmem [shape: f32[16,64], index: 0, kind: input, shape index: {}]
  %s1 = inlined_call_operand.vmem [shape: f32[64,32], index: 1, kind: input, shape index: {}]
  %s2 = inlined_call_operand.vmem [shape: f32[1,32], index: 2, kind: input, shape index: {}]
  %s3 = inlined_call_operand.vmem [shape: f32[16,32], index: 3, kind: input, shape index: {}]
  %s4 = inlined_call_operand.vmem [shape: f32[1,32], index: 4, kind: input, shape index: {}]
  %s5 = inlined_call_operand.vmem [shape: f32[1,32], index: 5, kind: input, shape index: {}]
  %s6 = inlined_call_operand.hbm [shape: f32[16,32], index: 6, kind: output, shape index: {}]
  %s7 = sld [smem:[#allocation0]]
  $region42: #{tpu_custom_call.1} parent=0
    _
  %s9 = ssub.s32 1, %s7
  %s10 = scalar_select 0, %s9, %s7
  $region1: #{tpu_custom_call.1} parent=0
    #allocation3 [shape = 'u8[8192]{0}', space=vmem, size = 0x2000, scoped, tag = 'output window, operand 0, single buffered']
    #allocation4 [shape = 's32[1]{0}', space=sflag, size = 0x4, scoped, tag = 'scoped memory for tpu_custom_call.1']
    %11 = vsyncpa [#allocation4], 0
    // Predicated region
    $region2: #{tpu_custom_call.1} parent=1 // pred_check
      _
    $region3: #{tpu_custom_call.1} parent=1 // pred_check_branch
      %13 = sbr.rel (0) target = $region5
    $region4: #{tpu_custom_call.1} parent=1 // pred_region
      _
    $region5: #{tpu_custom_call.1} parent=1 // pred_fallthru
      _
    // Predicated region
    $region6: #{tpu_custom_call.1} parent=1 // pred_check
      _
    $region7: #{tpu_custom_call.1} parent=1 // pred_check_branch
      %15 = sbr.rel (0) target = $region9
    $region8: #{tpu_custom_call.1} parent=1 // pred_region
      _
    $region9: #{tpu_custom_call.1} parent=1 // pred_fallthru
      _
    // Predicated region
    $region10: #{tpu_custom_call.1} parent=1 // pred_check
      _
    $region11: #{tpu_custom_call.1} parent=1 // pred_check_branch
      %17 = sbr.rel (0) target = $region13
    $region12: #{tpu_custom_call.1} parent=1 // pred_region
      _
    $region13: #{tpu_custom_call.1} parent=1 // pred_fallthru
      _
    // Predicated region
    $region14: #{tpu_custom_call.1} parent=1 // pred_check
      _
    $region15: #{tpu_custom_call.1} parent=1 // pred_check_branch
      %19 = sbr.rel (0) target = $region17
    $region16: #{tpu_custom_call.1} parent=1 // pred_region
      _
    $region17: #{tpu_custom_call.1} parent=1 // pred_fallthru
      _
    // Predicated region
    $region18: #{tpu_custom_call.1} parent=1 // pred_check
      _
    $region19: #{tpu_custom_call.1} parent=1 // pred_check_branch
      %21 = sbr.rel (0) target = $region21
    $region20: #{tpu_custom_call.1} parent=1 // pred_region
      _
    $region21: #{tpu_custom_call.1} parent=1 // pred_fallthru
      _
    // Predicated region
    $region22: #{tpu_custom_call.1} parent=1 // pred_check
      _
    $region23: #{tpu_custom_call.1} parent=1 // pred_check_branch
      %23 = sbr.rel (0) target = $region25
    $region24: #{tpu_custom_call.1} parent=1 // pred_region
      _
    $region25: #{tpu_custom_call.1} parent=1 // pred_fallthru
      _
    %p24 = scmp.eq.s32.totalorder 0, 0
    // Predicated region
    $region26: #{tpu_custom_call.1} parent=1 // pred_check
      %p25 = pneg %p24
    $region27: #{tpu_custom_call.1} parent=1 // pred_check_branch
      %27 = sbr.rel (%p25) target = $region29
    $region28: #{tpu_custom_call.1} parent=1 // pred_region
      %vm28 = vcmask 261120
      %29 = vst.msk [vmem:[#allocation2] sm:$0xff] %vm28, 0.0
      %30 = vst.msk [vmem:[#allocation2 + $0x8] sm:$0xff] %vm28, 0.0
    $region29: #{tpu_custom_call.1} parent=1 // pred_fallthru
      _
    %v31 = vld [vmem:[#allocation2] sm:$0xff]
    %v32 = vld [vmem:[#allocation2 + $0x8] sm:$0xff]
    %v33 = vld [vmem:[%s0] sm:$0xff]
    %v34 = vld [vmem:[%s0 + $0x8] sm:$0xff]
    %v35 = vld [vmem:[%s1] sm:$0xff]
    %v36 = vld [vmem:[%s1 + $0x8] sm:$0xff]
    %v37 = vld [vmem:[%s1 + $0x10] sm:$0xff]
    %v38 = vld [vmem:[%s1 + $0x18] sm:$0xff]
    %v39 = vld [vmem:[%s1 + $0x20] sm:$0xff]
    %v40 = vld [vmem:[%s1 + $0x28] sm:$0xff]
    %v41 = vld [vmem:[%s1 + $0x30] sm:$0xff]
    %v42 = vld [vmem:[%s1 + $0x38] sm:$0xff]
    %vm43 = vcmask 523264
    %v45 = vsel %vm43, %v33, 0
    %v48 = vsel %vm43, %v34, 0
    %50 = vmatprep.subr.mxu0 0.0
    %51 = vmatpush1.msra.mxu0 %v35
    %52 = vmatprep.subr.mxu0 0.0
    %53 = vmatpush1.msra.mxu0 %v36
    %54 = vmatprep.subr.mxu0 0.0
    %55 = vmatpush1.msra.mxu0 %v37
    %56 = vmatprep.subr.mxu0 0.0
    %57 = vmatpush1.msra.mxu0 %v38
    %58 = vmatprep.subr.mxu0 0.0
    %59 = vmatpush1.msra.mxu0 %v39
    %60 = vmatprep.subr.mxu0 0.0
    %61 = vmatpush1.msra.mxu0 %v40
    %62 = vmatprep.subr.mxu0 0.0
    %63 = vmatpush1.msra.mxu0 %v41
    %64 = vmatprep.subr.mxu0 0.0
    %65 = vmatpush1.msra.mxu0 %v42
    %66 = vmatprep.subr.mxu0 0.0
    %67 = vmatpush1.msra.mxu0 0.0
    %68 = vmatprep.subr.mxu0 0.0
    %69 = vmatpush1.msra.mxu0 0.0
    %70 = vmatprep.subr.mxu0 0.0
    %71 = vmatpush1.msra.mxu0 0.0
    %72 = vmatprep.subr.mxu0 0.0
    %73 = vmatpush1.msra.mxu0 0.0
    %74 = vmatprep.subr.mxu0 0.0
    %75 = vmatpush1.msra.mxu0 0.0
    %76 = vmatprep.subr.mxu0 0.0
    %77 = vmatpush1.msra.mxu0 0.0
    %78 = vmatprep.subr.mxu0 0.0
    %79 = vmatpush1.msra.mxu0 0.0
    %80 = vmatprep.subr.mxu0 0.0
    %81 = vmatpush1.msra.mxu0 0.0
    %82 = vmatprep.subr.mxu0 0.0
    %83 = vmatpush1.msra.mxu0 0.0
    %84 = vmatprep.subr.mxu0 0.0
    %85 = vmatpush1.msra.mxu0 0.0
    %86 = vmatprep.subr.mxu0 0.0
    %87 = vmatpush1.msra.mxu0 0.0
    %88 = vmatprep.subr.mxu0 0.0
    %89 = vmatpush1.msra.mxu0 0.0
    %90 = vmatprep.subr.mxu0 0.0
    %91 = vmatpush1.msra.mxu0 0.0
    %92 = vmatprep.subr.mxu0 0.0
    %93 = vmatpush1.msra.mxu0 0.0
    %94 = vmatprep.subr.mxu0 0.0
    %95 = vmatpush1.msra.mxu0 0.0
    %96 = vmatprep.subr.mxu0 0.0
    %97 = vmatpush1.msra.mxu0 0.0
    %98 = vmatprep.subr.mxu0 0.0
    %99 = vmatpush1.msra.mxu0 0.0
    %100 = vmatprep.subr.mxu0 0.0
    %101 = vmatpush1.msra.mxu0 0.0
    %102 = vmatprep.subr.mxu0 0.0
    %103 = vmatpush1.msra.mxu0 0.0
    %104 = vmatprep.subr.mxu0 0.0
    %105 = vmatpush1.msra.mxu0 0.0
    %106 = vmatprep.subr.mxu0 0.0
    %107 = vmatpush1.msra.mxu0 0.0
    %108 = vmatprep.subr.mxu0 0.0
    %109 = vmatpush1.msra.mxu0 0.0
    %110 = vmatprep.subr.mxu0 0.0
    %111 = vmatpush1.msra.mxu0 0.0
    %112 = vmatprep.subr.mxu0 0.0
    %113 = vmatpush1.msra.mxu0 0.0
    %114 = vmatprep.mubr.f32.mxu0 0.0
    %115 = vmatmul.mubr.f32.gmra.mrb[0].mxu0 %v45
    %v116 = vpop.f32.mrb[0].mxu0
    %v117 = vadd.f32 0.0, %v116
    %v118 = vpop.f32.mrb[0].mxu0
    %119 = vmatprep.mubr.f32.mxu0 0.0
    %120 = vmatmul.mubr.f32.gmra.mrb[0].mxu0 %v48
    %v121 = vpop.f32.mrb[0].mxu0
    %v122 = vadd.f32 0.0, %v121
    %v123 = vpop.f32.mrb[0].mxu0
    %124 = vdwg.mxu0
    %v125 = vadd.f32 %v31, %v117
    %v126 = vadd.f32 %v32, %v122
    %vm127 = vcmask 261120
    %128 = vst.msk [vmem:[#allocation2] sm:$0xff] %vm127, %v125
    %129 = vst.msk [vmem:[#allocation2 + $0x8] sm:$0xff] %vm127, %v126
    // Predicated region
    $region30: #{tpu_custom_call.1} parent=1 // pred_check
      %p130 = pneg %p24
    $region31: #{tpu_custom_call.1} parent=1 // pred_check_branch
      %132 = sbr.rel (%p130) target = $region33
    $region32: #{tpu_custom_call.1} parent=1 // pred_region
      %v133 = vld [vmem:[#allocation2] sm:$0xff]
      %v134 = vld [vmem:[#allocation2 + $0x8] sm:$0xff]
      %v135 = vld [vmem:[%s2] sm:$0x1]
      %v137 = vlaneseq
      %v138 = vshrl.u32 %v137, 7
      %v139 = vsub.s32 0, %v138
      %v140 = vrot.slane %v135, %v139
      %v142 = vadd.f32 %v133, %v140
      %v143 = vadd.f32 %v134, %v140
      %v144 = vld [vmem:[%s3] sm:$0xff]
      %v145 = vld [vmem:[%s3 + $0x8] sm:$0xff]
      %v146 = vadd.f32 %v142, %v144
      %v147 = vadd.f32 %v143, %v145
      %v148 = vsel %vm127, %v146, 0.0
      %149 = vadd.xlane.f32.xlu0 %v148
      %v150 = vpop.xlane.xlu0 %149
      %v151 = vsel %vm127, %v147, 0.0
      %152 = vadd.xlane.f32.xlu0 %v151
      %v153 = vpop.xlane.xlu0 %152
      %v154 = vrcp.pop 32.0
      %v155 = vmul.f32 %v150, %v154
      %v156 = vmul.f32 %v153, %v154
      %v157 = vsub.f32 %v146, %v155
      %v158 = vsub.f32 %v147, %v156
      %v159 = vmul.f32 %v157, %v157
      %v160 = vmul.f32 %v158, %v158
      %v161 = vsel %vm127, %v159, 0.0
      %162 = vadd.xlane.f32.xlu0 %v161
      %v163 = vpop.xlane.xlu0 %162
      %v164 = vsel %vm127, %v160, 0.0
      %165 = vadd.xlane.f32.xlu0 %v164
      %v166 = vpop.xlane.xlu0 %165
      %v167 = vmul.f32 %v163, %v154
      %v168 = vmul.f32 %v166, %v154
      %v169 = vadd.f32 %v167, 1e-12
      %v170 = vadd.f32 %v168, 1e-12
      %v171 = vrsqrt.pop %v169
      %v172 = vrsqrt.pop %v170
      %v173 = vmul.f32 %v157, %v171
      %v174 = vmul.f32 %v158, %v172
      %v175 = vld [vmem:[%s4] sm:$0x1]
      %v177 = vlaneseq
      %v178 = vshrl.u32 %v177, 7
      %v179 = vsub.s32 0, %v178
      %v180 = vrot.slane %v175, %v179
      %v182 = vmul.f32 %v173, %v180
      %v183 = vmul.f32 %v174, %v180
      %v184 = vld [vmem:[%s5] sm:$0x1]
      %v186 = vlaneseq
      %v187 = vshrl.u32 %v186, 7
      %v188 = vsub.s32 0, %v187
      %v189 = vrot.slane %v184, %v188
      %v191 = vadd.f32 %v182, %v189
      %v192 = vadd.f32 %v183, %v189
      %193 = vst.msk [vmem:[#allocation3] sm:$0xff] %vm127, %v191
      %194 = vst.msk [vmem:[#allocation3 + $0x8] sm:$0xff] %vm127, %v192
    $region33: #{tpu_custom_call.1} parent=1 // pred_fallthru
      _
    // Predicated region
    $region34: #{tpu_custom_call.1} parent=1 // pred_check
      _
    $region35: #{tpu_custom_call.1} parent=1 // pred_check_branch
      %196 = sbr.rel (0) target = $region37
    $region36: #{tpu_custom_call.1} parent=1 // pred_region
      %s198 = ssub.s32 256, 256
      %199 = vsyncadd [#allocation4], %s198
      %s200 = sshll.u32 [#allocation3], 4
      %s201 = int_to_ptr.vmem [resolvable:$true] %s200
      %206 = dma.vmem_to_hbm [thread:$0]  %s201, 256, %s6, [#allocation4], 128, 128, 8
    $region37: #{tpu_custom_call.1} parent=1 // pred_fallthru
      _
    // Predicated region
    $region38: #{tpu_custom_call.1} parent=1 // pred_check
      _
    $region39: #{tpu_custom_call.1} parent=1 // pred_check_branch
      %208 = sbr.rel (0) target = $region41
    $region40: #{tpu_custom_call.1} parent=1 // pred_region
      %209 = dma.done [#allocation4], 256
    $region41: #{tpu_custom_call.1} parent=1 // pred_fallthru
      _
    %210 = vsyncpa [#allocation4], 1

</llo_original>
